<compile_context>
chip_gen: v5e
topology: v5e:2x2
jax: 0.10.0
libtpu: 0.0.40
codegen_flags: <defaults>
</compile_context>

<pallas_src>
import jax
import jax.numpy as jnp
from jax.experimental import pallas as pl
from jax.experimental.pallas import tpu as pltpu


def _bpr_kernel(uid_ref, iid_ref, jid_ref, u_hl_ref, i_hl_ref, out_ref):
    """One batch tile: bf16 one-hot MXU gather + fused multiply + D-reduction.

    uid/iid/jid : (1, tile_b) int32       batch indices, lane-dense
    u_hl        : (2*D, num_users) bf16   user table, transposed, [hi; lo] split
    i_hl        : (2*D, num_items) bf16   item table, transposed, [hi; lo] split
    out         : (2, tile_b) f32         row 0 = pred_i, row 1 = pred_j
    """
    two_d, num_users = u_hl_ref.shape
    _, num_items = i_hl_ref.shape
    d = two_d // 2
    tile_b = uid_ref.shape[1]

    uid = uid_ref[...]                                           # (1, tb)
    # Fuse the two item lookups along the lane axis -> one mask, one matmul.
    ij = jnp.concatenate([iid_ref[...], jid_ref[...]], axis=1)   # (1, 2*tb)

    # NOTE: an in-kernel jnp.take / dynamic-gather would avoid the O(K*tile_b)
    # mask work entirely, but Mosaic only lowers lax.gather for a narrow 2-D
    # take_along_axis pattern that this (table, id-vector) lookup does not fit,
    # so the portable formulation is a one-hot selection on the MXU.  It is
    # kept cheap: bf16 masks (exact 0/1), bf16 hi/lo tables (native MXU path),
    # fused item matmul.  See the module-level TODO for the large-table path.
    u_iota = jax.lax.broadcasted_iota(jnp.int32, (num_users, tile_b), 0)
    i_iota = jax.lax.broadcasted_iota(jnp.int32, (num_items, 2 * tile_b), 0)
    sel_u = (u_iota == uid).astype(jnp.bfloat16)                 # (Ku, tb)
    sel_ij = (i_iota == ij).astype(jnp.bfloat16)                 # (Ki, 2*tb)

    # bf16 x bf16 MXU matmuls with f32 accumulation.  Because the masks are
    # exact 0/1 and the hi/lo parts are exact bf16 values, each gathered hi/lo
    # is bit-exact; hi+lo reconstructs the f32 embedding to ~1e-5 relative.
    u_g = jnp.dot(u_hl_ref[...], sel_u, preferred_element_type=jnp.float32)    # (2D, tb)
    ij_g = jnp.dot(i_hl_ref[...], sel_ij, preferred_element_type=jnp.float32)  # (2D, 2*tb)

    u_t = u_g[:d, :] + u_g[d:, :]                                # (D, tb)  gathered users
    ij_t = ij_g[:d, :] + ij_g[d:, :]                             # (D, 2*tb)
    i_t = ij_t[:, :tile_b]                                       # (D, tb)  gathered item_i
    j_t = ij_t[:, tile_b:]                                       # (D, tb)  gathered item_j

    # Fused multiply + reduction over D (sublane axis) -> lane-dense rows of the
    # merged (2, tile_b) output block; one unmasked writeback DMA per step.
    out_ref[0:1, :] = jnp.sum(u_t * i_t, axis=0, keepdims=True)
    out_ref[1:2, :] = jnp.sum(u_t * j_t, axis=0, keepdims=True)


def prepare_tables(U, I):
    """One-time table preprocessing (hoisted out of the per-call hot path).

    Returns the embedding tables transposed to (D, K) and split into stacked
    bf16 [hi; lo] halves of shape (2*D, K) -- same total bytes as the f32
    table, but every gather matmul becomes a native bf16 MXU matmul while the
    reconstructed lookup stays accurate to ~1e-5 relative.
    """
    def split_hi_lo(T):
        Tt = T.astype(jnp.float32).T                      # (D, K)
        hi = Tt.astype(jnp.bfloat16)
        lo = (Tt - hi.astype(jnp.float32)).astype(jnp.bfloat16)
        return jnp.concatenate([hi, lo], axis=0)          # (2*D, K)

    return split_hi_lo(U), split_hi_lo(I)


def _vmem_bytes_estimate(num_users, num_items, two_d, tile_b, table_buffers):
    """Rough per-step VMEM footprint (bytes) used to size tile_b / vmem_limit."""
    d = two_d // 2
    tables = (num_users + num_items) * two_d * 2 * table_buffers     # bf16 resident tables
    masks = (num_users + 2 * num_items) * tile_b * 2                 # bf16 one-hot masks
    gathered = two_d * 3 * tile_b * 4 + d * 3 * tile_b * 4           # f32 matmul outs + hi+lo recombine
    io = 2 * (3 * tile_b * 4 + 2 * tile_b * 4)                       # double-buffered id/output blocks
    return tables + masks + gathered + io


def bpr_forward(U_hl, I_hl, user, item_i, item_j, *, tile_b=512,
                vmem_budget_bytes=48 * 1024 * 1024):
    """Pallas implementation of bpr.forward.

    U_hl: (2*D, num_users) bf16, I_hl: (2*D, num_items) bf16  (from prepare_tables)
    user/item_i/item_j: (B,) integer index vectors
    returns (pred_i, pred_j), each (B,) float32

    vmem_budget_bytes defaults to 48 MiB (safe on v7x's 64 MiB physical VMEM);
    on v5e/v6e (128 MiB) it can be raised to ~100-120 MiB to allow larger
    resident tables / larger tile_b.
    """
    two_d, num_users = U_hl.shape
    _, num_items = I_hl.shape
    assert two_d % 2 == 0
    B = user.shape[0]

    # Single-buffer the constant (VMEM-resident) table blocks once they are big
    # enough to matter; tiny tables keep the default pipeline behavior.
    table_bytes_per_buf = (num_users + num_items) * two_d * 2
    single_buffer_tables = table_bytes_per_buf >= (1 << 20)
    table_buffers = 1 if single_buffer_tables else 2

    # Lane-dense batch tiling: tile_b multiple of 128, clamped to padded batch,
    # shrunk until the estimated footprint fits the VMEM budget.
    tile_b = max(128, (int(tile_b) // 128) * 128)
    tile_b = min(tile_b, 128 * pl.cdiv(B, 128))
    while (tile_b > 128 and
           _vmem_bytes_estimate(num_users, num_items, two_d, tile_b,
                                table_buffers) > 0.8 * vmem_budget_bytes):
        tile_b = max(128, ((tile_b // 2) // 128) * 128)

    n_tiles = pl.cdiv(B, tile_b)
    Bp = n_tiles * tile_b                       # padded batch (pad rows use index 0)

    est = _vmem_bytes_estimate(num_users, num_items, two_d, tile_b, table_buffers)
    vmem_limit_bytes = int(max(16 << 20,
                               min(vmem_budget_bytes, 2 * est + (8 << 20)),
                               est + (4 << 20)))

    # Only shard the batch grid across TensorCores (v7x) when each core gets
    # real work; otherwise avoid duplicating the resident tables per core.
    dims = ("parallel",) if n_tiles >= 4 else ("arbitrary",)

    def _prep_ids(ids):
        ids = ids.astype(jnp.int32)
        ids = jnp.pad(ids, (0, Bp - B))         # pad rows use valid index 0; sliced off below
        return ids.reshape(1, Bp)               # batch on the lane axis

    uid = _prep_ids(user)
    iid = _prep_ids(item_i)
    jid = _prep_ids(item_j)

    id_spec = pl.BlockSpec((1, tile_b), lambda b: (0, b))
    table_kwargs = {}
    if single_buffer_tables:
        table_kwargs = dict(pipeline_mode=pl.Buffered(1))
    u_spec = pl.BlockSpec((two_d, num_users), lambda b: (0, 0), **table_kwargs)
    i_spec = pl.BlockSpec((two_d, num_items), lambda b: (0, 0), **table_kwargs)

    out = pl.pallas_call(
        _bpr_kernel,
        out_shape=jax.ShapeDtypeStruct((2, Bp), jnp.float32),
        grid_spec=pltpu.PrefetchScalarGridSpec(
            num_scalar_prefetch=0,
            grid=(n_tiles,),
            in_specs=[
                id_spec,        # user ids tile
                id_spec,        # item_i ids tile
                id_spec,        # item_j ids tile
                u_spec,         # user table (2D, Ku), VMEM-resident
                i_spec,         # item table (2D, Ki), VMEM-resident
            ],
            out_specs=pl.BlockSpec((2, tile_b), lambda b: (0, b)),   # merged pred_i/pred_j
        ),
        compiler_params=pltpu.CompilerParams(
            dimension_semantics=dims,
            vmem_limit_bytes=vmem_limit_bytes,
        ),
    )(uid, iid, jid, U_hl, I_hl)

    return out[0, :B], out[1, :B]


def xavier_normal(key, shape):
    # nn.init.xavier_normal_ on a 2D weight: std = sqrt(2 / (fan_in + fan_out)).
    std = (2.0 / (shape[0] + shape[1])) ** 0.5
    return std * jax.random.normal(key, shape, dtype=jnp.float32)


if __name__ == "__main__":
    num_users, num_items, dimension = 64, 128, 32
    batch = 300   # deliberately not a multiple of the tile to exercise cdiv + padding

    key = jax.random.PRNGKey(0)
    k_u, k_i, k_uid, k_ii, k_ij = jax.random.split(key, 5)

    # Deterministic parameter init (xavier_normal, as in the module __init__).
    U_w = xavier_normal(k_u, (num_users, dimension))
    I_w = xavier_normal(k_i, (num_items, dimension))

    # Deterministic example inputs.
    user_ids = jax.random.randint(k_uid, (batch,), 0, num_users, dtype=jnp.int32)
    item_i_ids = jax.random.randint(k_ii, (batch,), 0, num_items, dtype=jnp.int32)
    item_j_ids = jax.random.randint(k_ij, (batch,), 0, num_items, dtype=jnp.int32)

    # Table preprocessing done ONCE, outside the per-call path.
    U_hl, I_hl = prepare_tables(U_w, I_w)

    # tile_b=128 here just to get a multi-step grid at this small demo batch;
    # real workloads keep the default 512 (auto-shrunk if VMEM-budget bound).
    pred_i, pred_j = bpr_forward(U_hl, I_hl, user_ids, item_i_ids, item_j_ids,
                                 tile_b=128)
    jax.block_until_ready((pred_i, pred_j))

    # Pure-JAX reference check.  With the bf16 hi/lo split the gathered
    # embeddings match f32 to ~1e-5 relative, so the tolerance is much tighter
    # than the old default-precision f32 MXU path (which needed 2e-3).
    ref_i = jnp.sum(U_w[user_ids] * I_w[item_i_ids], axis=-1)
    ref_j = jnp.sum(U_w[user_ids] * I_w[item_j_ids], axis=-1)
    assert pred_i.shape == (batch,) and pred_j.shape == (batch,)
    assert jnp.allclose(pred_i, ref_i, atol=5e-4, rtol=5e-4), \
        float(jnp.max(jnp.abs(pred_i - ref_i)))
    assert jnp.allclose(pred_j, ref_j, atol=5e-4, rtol=5e-4), \
        float(jnp.max(jnp.abs(pred_j - ref_j)))

    print("KERNEL_OK")
</pallas_src>

<mosaic_0001>
module attributes {stable_mosaic.version = 11 : i64} {
  func.func @_bpr_kernel(%arg0: i32, %arg1: memref<1x128xi32, #tpu.memory_space<vmem>>, %arg2: memref<1x128xi32, #tpu.memory_space<vmem>>, %arg3: memref<1x128xi32, #tpu.memory_space<vmem>>, %arg4: memref<64x64xbf16, #tpu.memory_space<vmem>>, %arg5: memref<64x128xbf16, #tpu.memory_space<vmem>>, %arg6: memref<2x128xf32, #tpu.memory_space<vmem>>) attributes {dimension_semantics = [#tpu.dimension_semantics<arbitrary>], iteration_bounds = array<i64: 3>, scalar_prefetch = 0 : i64, scratch_operands = 0 : i64, tpu.core_type = #tpu.core_type<tc>, window_params = [{transform_indices = @transform_0, window_bounds = array<i64: 1, 128>}, {transform_indices = @transform_1, window_bounds = array<i64: 1, 128>}, {transform_indices = @transform_2, window_bounds = array<i64: 1, 128>}, {pipeline_mode = #tpu.pipeline_mode<synchronous>, transform_indices = @transform_3, window_bounds = array<i64: 64, 64>}, {pipeline_mode = #tpu.pipeline_mode<synchronous>, transform_indices = @transform_4, window_bounds = array<i64: 64, 128>}, {transform_indices = @transform_5, window_bounds = array<i64: 2, 128>}]} {
    %c0 = arith.constant 0 : index
    %c0_0 = arith.constant 0 : index
    %0 = vector.load %arg1[%c0, %c0_0] : memref<1x128xi32, #tpu.memory_space<vmem>>, vector<1x128xi32>
    %c0_1 = arith.constant 0 : index
    %c0_2 = arith.constant 0 : index
    %1 = vector.load %arg2[%c0_1, %c0_2] : memref<1x128xi32, #tpu.memory_space<vmem>>, vector<1x128xi32>
    %c0_3 = arith.constant 0 : index
    %c0_4 = arith.constant 0 : index
    %2 = vector.load %arg3[%c0_3, %c0_4] : memref<1x128xi32, #tpu.memory_space<vmem>>, vector<1x128xi32>
    %3 = tpu.concatenate %1, %2 in 1 : vector<1x128xi32>, vector<1x128xi32> -> vector<1x256xi32>
    %4 = tpu.iota {dimensions = array<i32: 0>} : vector<64x128xi32>
    %5 = tpu.iota {dimensions = array<i32: 0>} : vector<128x256xi32>
    %6 = vector.broadcast %0 : vector<1x128xi32> to vector<64x128xi32>
    %7 = arith.cmpi eq, %4, %6 : vector<64x128xi32>
    %8 = arith.extui %7 : vector<64x128xi1> to vector<64x128xi32>
    %9 = arith.sitofp %8 : vector<64x128xi32> to vector<64x128xf32>
    %10 = arith.truncf %9 : vector<64x128xf32> to vector<64x128xbf16>
    %11 = vector.broadcast %3 : vector<1x256xi32> to vector<128x256xi32>
    %12 = arith.cmpi eq, %5, %11 : vector<128x256xi32>
    %13 = arith.extui %12 : vector<128x256xi1> to vector<128x256xi32>
    %14 = arith.sitofp %13 : vector<128x256xi32> to vector<128x256xf32>
    %15 = arith.truncf %14 : vector<128x256xf32> to vector<128x256xbf16>
    %c0_5 = arith.constant 0 : index
    %c0_6 = arith.constant 0 : index
    %16 = vector.load %arg4[%c0_5, %c0_6] : memref<64x64xbf16, #tpu.memory_space<vmem>>, vector<64x64xbf16>
    %cst = arith.constant dense<0.000000e+00> : vector<64x128xf32>
    %17 = tpu.matmul %16, %10, %cst {dimension_numbers = #tpu.dot_dimension_numbers<[1], [0], [0], [1], [0, 0, 1, 1], [], []>} : vector<64x64xbf16>, vector<64x128xbf16>, vector<64x128xf32> -> vector<64x128xf32>
    %c0_7 = arith.constant 0 : index
    %c0_8 = arith.constant 0 : index
    %18 = vector.load %arg5[%c0_7, %c0_8] : memref<64x128xbf16, #tpu.memory_space<vmem>>, vector<64x128xbf16>
    %cst_9 = arith.constant dense<0.000000e+00> : vector<64x256xf32>
    %19 = tpu.matmul %18, %15, %cst_9 {dimension_numbers = #tpu.dot_dimension_numbers<[1], [0], [0], [1], [0, 0, 1, 1], [], []>} : vector<64x128xbf16>, vector<128x256xbf16>, vector<64x256xf32> -> vector<64x256xf32>
    %20 = vector.extract_strided_slice %17 {offsets = [0, 0], sizes = [32, 128], strides = [1, 1]} : vector<64x128xf32> to vector<32x128xf32>
    %21 = vector.extract_strided_slice %17 {offsets = [32, 0], sizes = [32, 128], strides = [1, 1]} : vector<64x128xf32> to vector<32x128xf32>
    %22 = arith.addf %20, %21 : vector<32x128xf32>
    %23 = vector.extract_strided_slice %19 {offsets = [0, 0], sizes = [32, 256], strides = [1, 1]} : vector<64x256xf32> to vector<32x256xf32>
    %24 = vector.extract_strided_slice %19 {offsets = [32, 0], sizes = [32, 256], strides = [1, 1]} : vector<64x256xf32> to vector<32x256xf32>
    %25 = arith.addf %23, %24 : vector<32x256xf32>
    %26 = vector.extract_strided_slice %25 {offsets = [0, 0], sizes = [32, 128], strides = [1, 1]} : vector<32x256xf32> to vector<32x128xf32>
    %27 = vector.extract_strided_slice %25 {offsets = [0, 128], sizes = [32, 128], strides = [1, 1]} : vector<32x256xf32> to vector<32x128xf32>
    %28 = arith.mulf %22, %26 : vector<32x128xf32>
    %cst_10 = arith.constant dense<0.000000e+00> : vector<128xf32>
    %29 = vector.multi_reduction <add>, %28, %cst_10 [0] : vector<32x128xf32> to vector<128xf32>
    %30 = vector.shape_cast %29 : vector<128xf32> to vector<1x128xf32>
    %c0_11 = arith.constant 0 : index
    %c0_12 = arith.constant 0 : index
    %31 = vector.load %arg6[%c0_11, %c0_12] : memref<2x128xf32, #tpu.memory_space<vmem>>, vector<1x128xf32>
    tpu.vector_store %arg6[%c0_11, %c0_12], %30 {strides = array<i32>} : memref<2x128xf32, #tpu.memory_space<vmem>>, vector<1x128xf32>,
    %32 = arith.mulf %22, %27 : vector<32x128xf32>
    %cst_13 = arith.constant dense<0.000000e+00> : vector<128xf32>
    %33 = vector.multi_reduction <add>, %32, %cst_13 [0] : vector<32x128xf32> to vector<128xf32>
    %34 = vector.shape_cast %33 : vector<128xf32> to vector<1x128xf32>
    %c1 = arith.constant 1 : index
    %c0_14 = arith.constant 0 : index
    %35 = vector.load %arg6[%c1, %c0_14] : memref<2x128xf32, #tpu.memory_space<vmem>>, vector<1x128xf32>
    tpu.vector_store %arg6[%c1, %c0_14], %34 {strides = array<i32>} : memref<2x128xf32, #tpu.memory_space<vmem>>, vector<1x128xf32>,
    return
  }
  func.func @transform_0(%arg0: i32) -> (i32, i32) {
    %c0_i32 = arith.constant 0 : i32
    %c0_i32_0 = arith.constant 0 : i32
    return %c0_i32, %arg0 : i32, i32
  }
  func.func @transform_1(%arg0: i32) -> (i32, i32) {
    %c0_i32 = arith.constant 0 : i32
    %c0_i32_0 = arith.constant 0 : i32
    return %c0_i32, %arg0 : i32, i32
  }
  func.func @transform_2(%arg0: i32) -> (i32, i32) {
    %c0_i32 = arith.constant 0 : i32
    %c0_i32_0 = arith.constant 0 : i32
    return %c0_i32, %arg0 : i32, i32
  }
  func.func @transform_3(%arg0: i32) -> (i32, i32) {
    %c0_i32 = arith.constant 0 : i32
    %c0_i32_0 = arith.constant 0 : i32
    %c0_i32_1 = arith.constant 0 : i32
    return %c0_i32, %c0_i32_0 : i32, i32
  }
  func.func @transform_4(%arg0: i32) -> (i32, i32) {
    %c0_i32 = arith.constant 0 : i32
    %c0_i32_0 = arith.constant 0 : i32
    %c0_i32_1 = arith.constant 0 : i32
    return %c0_i32, %c0_i32_0 : i32, i32
  }
  func.func @transform_5(%arg0: i32) -> (i32, i32) {
    %c0_i32 = arith.constant 0 : i32
    %c0_i32_0 = arith.constant 0 : i32
    return %c0_i32, %arg0 : i32, i32
  }
}

</mosaic_0001>

<llo_original>
// kernel: tpu_custom_call.1
$region0: #{tpu_custom_call.1}
  #allocation0 [shape = 'u32[]', space=smem, size = 0x4, offset = 0x4, fixed_abs, tag = 'smem constant byte address 0x4 - core index']
  #allocation1 [shape = 'u32[72,128]{1,0:T(1,128)}', space=vmem, size = 0x9000, scoped, tag = 'internal scratch']
  %s0 = inlined_call_operand.hbm [shape: s32[1,384], index: 0, kind: input, shape index: {}]
  %s1 = inlined_call_operand.hbm [shape: s32[1,384], index: 1, kind: input, shape index: {}]
  %s2 = inlined_call_operand.hbm [shape: s32[1,384], index: 2, kind: input, shape index: {}]
  %s3 = inlined_call_operand.hbm [shape: bf16[64,64], index: 3, kind: input, shape index: {}]
  %s4 = inlined_call_operand.hbm [shape: bf16[64,128], index: 4, kind: input, shape index: {}]
  %s5 = inlined_call_operand.hbm [shape: f32[2,384], index: 5, kind: output, shape index: {}]
  %s6 = sld [smem:[#allocation0]]
  $region73: #{tpu_custom_call.1} parent=0
    _
  %s8 = ssub.s32 1, %s6
  %s9 = scalar_select 0, %s8, %s6
  $region1: #{tpu_custom_call.1} parent=0
    #allocation2 [shape = 'u8[1024]{0}', space=vmem, size = 0x400, scoped, tag = 'input window, operand 0']
    #allocation3 [shape = 's32[2]{0}', space=sflag, size = 0x8, scoped, tag = 'scoped memory for tpu_custom_call.1']
    #allocation4 [shape = 's32[2]{0}', space=sflag, size = 0x8, scoped, tag = 'scoped memory for tpu_custom_call.1']
    #allocation5 [shape = 'u8[1024]{0}', space=vmem, size = 0x400, scoped, tag = 'input window, operand 1']
    #allocation6 [shape = 's32[2]{0}', space=sflag, size = 0x8, scoped, tag = 'scoped memory for tpu_custom_call.1']
    #allocation7 [shape = 'u8[1024]{0}', space=vmem, size = 0x400, scoped, tag = 'input window, operand 2']
    #allocation8 [shape = 'u8[16384]{0}', space=vmem, size = 0x4000, scoped, tag = 'input window, operand 3, single buffered']
    #allocation9 [shape = 's32[1]{0}', space=sflag, size = 0x4, scoped, tag = 'scoped memory for tpu_custom_call.1']
    #allocation10 [shape = 'u8[16384]{0}', space=vmem, size = 0x4000, scoped, tag = 'input window, operand 4, single buffered']
    #allocation11 [shape = 'u8[2048]{0}', space=vmem, size = 0x800, scoped, tag = 'output window, operand 0']
    %10 = vsyncpa [#allocation3], 0
    %s11 = scalar_lea.sflag [#allocation3], 1
    %12 = vsyncpa %s11, 0
    %13 = vsyncpa [#allocation6], 0
    %s14 = scalar_lea.sflag [#allocation6], 1
    %15 = vsyncpa %s14, 0
    %16 = vsyncpa [#allocation9], 0
    %17 = vsyncpa [#allocation4], 0
    %s18 = scalar_lea.sflag [#allocation4], 1
    %19 = vsyncpa %s18, 0
    loop: start=0, step=1, limit=5
    $region2: #{tpu_custom_call.1} parent=1 // loop_pre_header
      _
    $region3: #{tpu_custom_call.1} parent=1 // loop_header
      %s21 = sphi 0, %s25
      %p22 = scmp.ge.s32.totalorder %s21, 5
      %s31 = sphi 0, %s33
      %s34 = sphi 0, %s31
      %s35 = sphi 0, %s34
      %s51 = sphi 0, %s35
      %s57 = sphi 0, %s59
      %s60 = sphi 0, %s57
      %s61 = sphi 0, %s60
      %s77 = sphi 0, %s61
      %s83 = sphi 0, %s85
      %s86 = sphi 0, %s83
      %s87 = sphi 0, %s86
      %s103 = sphi 0, %s87
      %s107 = sphi 0, %s107
      %s109 = sphi 0, %s107
      %s110 = sphi 0, %s109
      %s124 = sphi 0, %s110
      %s128 = sphi 0, %s128
      %s130 = sphi 0, %s128
      %s131 = sphi 0, %s130
      %s145 = sphi 0, %s131
      %s151 = sphi 0, %s153
      %s154 = sphi 0, %s151
      %s155 = sphi 0, %s154
      %s171 = sphi 0, %s155
    $region4: #{tpu_custom_call.1} parent=1 // loop_header_branch
      %24 = sbr.rel (%p22) target = $region8
    $region5: #{tpu_custom_call.1} parent=1 // loop_body
      %s26 = ssub.s32 %s21, 1
      %s27 = ssub.s32 %s21, 2
      %s28 = sadd.s32 %s21, 1
      %s29 = ssub.s32 %s21, %s28
      %p30 = scmp.eq.s32.totalorder %s29, 0
      %s32 = sadd.s32 %s31, 1
      %s33 = scalar_select %p30, %s31, %s32
      %p36 = pneg %p30
      %p37 = scmp.eq.s32.totalorder %s21, 2
      %p38 = por %p36, %p37
      %p39 = scmp.ne.s32.totalorder %s31, %s34
      %p40 = scmp.eq.s32.totalorder %s21, 0
      %p41 = por %p39, %p40
      %p42 = scmp.ne.s32.totalorder %s31, %s34
      %p43 = scmp.eq.s32.totalorder %s26, 2
      %p44 = por %p42, %p43
      %p45 = scmp.ne.s32.totalorder %s34, %s35
      %p46 = scmp.eq.s32.totalorder %s26, 0
      %p47 = por %p45, %p46
      %p48 = scmp.ne.s32.totalorder %s34, %s35
      %p49 = scmp.eq.s32.totalorder %s27, 2
      %p50 = por %p48, %p49
      %p52 = scmp.ne.s32.totalorder %s35, %s51
      %p53 = scmp.eq.s32.totalorder %s27, 0
      %p54 = por %p52, %p53
      %s55 = ssub.s32 %s21, %s28
      %p56 = scmp.eq.s32.totalorder %s55, 0
      %s58 = sadd.s32 %s57, 1
      %s59 = scalar_select %p56, %s57, %s58
      %p62 = pneg %p56
      %p63 = scmp.eq.s32.totalorder %s21, 2
      %p64 = por %p62, %p63
      %p65 = scmp.ne.s32.totalorder %s57, %s60
      %p66 = scmp.eq.s32.totalorder %s21, 0
      %p67 = por %p65, %p66
      %p68 = scmp.ne.s32.totalorder %s57, %s60
      %p69 = scmp.eq.s32.totalorder %s26, 2
      %p70 = por %p68, %p69
      %p71 = scmp.ne.s32.totalorder %s60, %s61
      %p72 = scmp.eq.s32.totalorder %s26, 0
      %p73 = por %p71, %p72
      %p74 = scmp.ne.s32.totalorder %s60, %s61
      %p75 = scmp.eq.s32.totalorder %s27, 2
      %p76 = por %p74, %p75
      %p78 = scmp.ne.s32.totalorder %s61, %s77
      %p79 = scmp.eq.s32.totalorder %s27, 0
      %p80 = por %p78, %p79
      %s81 = ssub.s32 %s21, %s28
      %p82 = scmp.eq.s32.totalorder %s81, 0
      %s84 = sadd.s32 %s83, 1
      %s85 = scalar_select %p82, %s83, %s84
      %p88 = pneg %p82
      %p89 = scmp.eq.s32.totalorder %s21, 2
      %p90 = por %p88, %p89
      %p91 = scmp.ne.s32.totalorder %s83, %s86
      %p92 = scmp.eq.s32.totalorder %s21, 0
      %p93 = por %p91, %p92
      %p94 = scmp.ne.s32.totalorder %s83, %s86
      %p95 = scmp.eq.s32.totalorder %s26, 2
      %p96 = por %p94, %p95
      %p97 = scmp.ne.s32.totalorder %s86, %s87
      %p98 = scmp.eq.s32.totalorder %s26, 0
      %p99 = por %p97, %p98
      %p100 = scmp.ne.s32.totalorder %s86, %s87
      %p101 = scmp.eq.s32.totalorder %s27, 2
      %p102 = por %p100, %p101
      %p104 = scmp.ne.s32.totalorder %s87, %s103
      %p105 = scmp.eq.s32.totalorder %s27, 0
      %p106 = por %p104, %p105
      %s108 = sadd.s32 %s107, 1
      %p111 = scmp.eq.s32.totalorder %s21, 2
      %p112 = scmp.ne.s32.totalorder %s107, %s109
      %p113 = scmp.eq.s32.totalorder %s21, 0
      %p114 = por %p112, %p113
      %p115 = scmp.ne.s32.totalorder %s107, %s109
      %p116 = scmp.eq.s32.totalorder %s26, 2
      %p117 = por %p115, %p116
      %p118 = scmp.ne.s32.totalorder %s109, %s110
      %p119 = scmp.eq.s32.totalorder %s26, 0
      %p120 = por %p118, %p119
      %p121 = scmp.ne.s32.totalorder %s109, %s110
      %p122 = scmp.eq.s32.totalorder %s27, 2
      %p123 = por %p121, %p122
      %p125 = scmp.ne.s32.totalorder %s110, %s124
      %p126 = scmp.eq.s32.totalorder %s27, 0
      %p127 = por %p125, %p126
      %s129 = sadd.s32 %s128, 1
      %p132 = scmp.eq.s32.totalorder %s21, 2
      %p133 = scmp.ne.s32.totalorder %s128, %s130
      %p134 = scmp.eq.s32.totalorder %s21, 0
      %p135 = por %p133, %p134
      %p136 = scmp.ne.s32.totalorder %s128, %s130
      %p137 = scmp.eq.s32.totalorder %s26, 2
      %p138 = por %p136, %p137
      %p139 = scmp.ne.s32.totalorder %s130, %s131
      %p140 = scmp.eq.s32.totalorder %s26, 0
      %p141 = por %p139, %p140
      %p142 = scmp.ne.s32.totalorder %s130, %s131
      %p143 = scmp.eq.s32.totalorder %s27, 2
      %p144 = por %p142, %p143
      %p146 = scmp.ne.s32.totalorder %s131, %s145
      %p147 = scmp.eq.s32.totalorder %s27, 0
      %p148 = por %p146, %p147
      %s149 = ssub.s32 %s21, %s28
      %p150 = scmp.eq.s32.totalorder %s149, 0
      %s152 = sadd.s32 %s151, 1
      %s153 = scalar_select %p150, %s151, %s152
      %p156 = pneg %p150
      %p157 = scmp.eq.s32.totalorder %s21, 2
      %p158 = por %p156, %p157
      %p159 = scmp.ne.s32.totalorder %s151, %s154
      %p160 = scmp.eq.s32.totalorder %s21, 0
      %p161 = por %p159, %p160
      %p162 = scmp.ne.s32.totalorder %s151, %s154
      %p163 = scmp.eq.s32.totalorder %s26, 2
      %p164 = por %p162, %p163
      %p165 = scmp.ne.s32.totalorder %s154, %s155
      %p166 = scmp.eq.s32.totalorder %s26, 0
      %p167 = por %p165, %p166
      %p168 = scmp.ne.s32.totalorder %s154, %s155
      %p169 = scmp.eq.s32.totalorder %s27, 2
      %p170 = por %p168, %p169
      %p172 = scmp.ne.s32.totalorder %s155, %s171
      %p173 = scmp.eq.s32.totalorder %s27, 0
      %p174 = por %p172, %p173
      %p175 = scmp.le.s32.totalorder 1, %s21
      %p176 = scmp.lt.s32.totalorder %s21, 4
      %p177 = pnand %p175, %p176
      %p178 = pneg %p177
      // Predicated region
      $region9: #{tpu_custom_call.1} parent=5 // pred_check
        _
      $region10: #{tpu_custom_call.1} parent=5 // pred_check_branch
        %180 = sbr.rel (%p177) target = $region12
      $region11: #{tpu_custom_call.1} parent=5 // pred_region
        %s181 = ssub.s32 %s21, 1
        // Predicated region
        $region13: #{tpu_custom_call.1} parent=11 // pred_check
          %p182 = pneg %p120
        $region14: #{tpu_custom_call.1} parent=11 // pred_check_branch
          %184 = sbr.rel (%p182) target = $region16
        $region15: #{tpu_custom_call.1} parent=11 // pred_region
          %186 = vsyncadd [#allocation9], 0
          %s187 = sshll.u32 %s3, 4
          %s188 = int_to_ptr.hbm [resolvable:$true] %s187
          %s189 = sshll.u32 [#allocation8], 4
          %s190 = int_to_ptr.vmem [resolvable:$true] %s189
          %195 = dma.hbm_to_vmem [thread:$0]  %s188, 512, %s190, [#allocation9], 64, 64, 4
        $region16: #{tpu_custom_call.1} parent=11 // pred_fallthru
          _
        // Predicated region
        $region17: #{tpu_custom_call.1} parent=11 // pred_check
          %p196 = pneg %p141
        $region18: #{tpu_custom_call.1} parent=11 // pred_check_branch
          %198 = sbr.rel (%p196) target = $region20
        $region19: #{tpu_custom_call.1} parent=11 // pred_region
          %200 = vsyncadd [#allocation9], 0
          %s201 = sshll.u32 %s4, 4
          %s202 = int_to_ptr.hbm [resolvable:$true] %s201
          %s203 = sshll.u32 [#allocation10], 4
          %s204 = int_to_ptr.vmem [resolvable:$true] %s203
          %209 = dma.hbm_to_vmem [thread:$0]  %s202, 512, %s204, [#allocation9], 64, 64, 4
        $region20: #{tpu_custom_call.1} parent=11 // pred_fallthru
          _
      $region12: #{tpu_custom_call.1} parent=5 // pred_fallthru
        _
      %p210 = scmp.lt.s32.totalorder %s21, 3
      // Predicated region
      $region21: #{tpu_custom_call.1} parent=5 // pred_check
        %p211 = pneg %p210
      $region22: #{tpu_custom_call.1} parent=5 // pred_check_branch
        %213 = sbr.rel (%p211) target = $region24
      $region23: #{tpu_custom_call.1} parent=5 // pred_region
        // Predicated region
        $region25: #{tpu_custom_call.1} parent=23 // pred_check
          %p214 = pneg %p41
        $region26: #{tpu_custom_call.1} parent=23 // pred_check_branch
          %216 = sbr.rel (%p214) target = $region28
        $region27: #{tpu_custom_call.1} parent=23 // pred_region
          %s217 = sand.u32 %s31, 1
          %s218 = scalar_lea.sflag [#allocation3], %s217
          %s219 = sand.u32 %s31, 1
          %s220 = scalar_lea.vmem [#allocation2], %s219
          %222 = vsyncadd %s218, 0
          %s223 = scalar_lea.hbm %s0, %s21
          %s225 = sshll.u32 %s223, 4
          %s226 = int_to_ptr.hbm [resolvable:$true] %s225
          %s227 = sshll.u32 %s220, 4
          %s228 = int_to_ptr.vmem [resolvable:$true] %s227
          %230 = dma.hbm_to_vmem [thread:$0]  %s226, 16, %s228, %s218
        $region28: #{tpu_custom_call.1} parent=23 // pred_fallthru
          _
        // Predicated region
        $region29: #{tpu_custom_call.1} parent=23 // pred_check
          %p231 = pneg %p67
        $region30: #{tpu_custom_call.1} parent=23 // pred_check_branch
          %233 = sbr.rel (%p231) target = $region32
        $region31: #{tpu_custom_call.1} parent=23 // pred_region
          %s234 = sand.u32 %s21, 1
          %s235 = scalar_lea.sflag [#allocation6], %s234
          %s236 = sand.u32 %s57, 1
          %s237 = scalar_lea.vmem [#allocation5], %s236
          %239 = vsyncadd %s235, 0
          %s240 = scalar_lea.hbm %s1, %s21
          %s242 = sshll.u32 %s240, 4
          %s243 = int_to_ptr.hbm [resolvable:$true] %s242
          %s244 = sshll.u32 %s237, 4
          %s245 = int_to_ptr.vmem [resolvable:$true] %s244
          %247 = dma.hbm_to_vmem [thread:$0]  %s243, 16, %s245, %s235
        $region32: #{tpu_custom_call.1} parent=23 // pred_fallthru
          _
        // Predicated region
        $region33: #{tpu_custom_call.1} parent=23 // pred_check
          %p248 = pneg %p93
        $region34: #{tpu_custom_call.1} parent=23 // pred_check_branch
          %250 = sbr.rel (%p248) target = $region36
        $region35: #{tpu_custom_call.1} parent=23 // pred_region
          %s251 = sand.u32 %s21, 1
          %s252 = scalar_lea.sflag [#allocation6], %s251
          %s253 = sand.u32 %s83, 1
          %s254 = scalar_lea.vmem [#allocation7], %s253
          %256 = vsyncadd %s252, 0
          %s257 = scalar_lea.hbm %s2, %s21
          %s259 = sshll.u32 %s257, 4
          %s260 = int_to_ptr.hbm [resolvable:$true] %s259
          %s261 = sshll.u32 %s254, 4
          %s262 = int_to_ptr.vmem [resolvable:$true] %s261
          %264 = dma.hbm_to_vmem [thread:$0]  %s260, 16, %s262, %s252
        $region36: #{tpu_custom_call.1} parent=23 // pred_fallthru
          _
      $region24: #{tpu_custom_call.1} parent=5 // pred_fallthru
        _
      %p265 = scmp.le.s32.totalorder 1, %s21
      %p266 = scmp.lt.s32.totalorder %s21, 4
      %p267 = pnand %p265, %p266
      %p268 = pneg %p267
      // Predicated region
      $region37: #{tpu_custom_call.1} parent=5 // pred_check
        _
      $region38: #{tpu_custom_call.1} parent=5 // pred_check_branch
        %270 = sbr.rel (%p267) target = $region40
      $region39: #{tpu_custom_call.1} parent=5 // pred_region
        %s271 = ssub.s32 %s21, 1
        %s272 = sand.u32 %s34, 1
        %s273 = scalar_lea.sflag [#allocation3], %s272
        %s274 = sand.u32 %s34, 1
        %s275 = scalar_lea.vmem [#allocation2], %s274
        // Predicated region
        $region41: #{tpu_custom_call.1} parent=39 // pred_check
          %p276 = pneg %p47
        $region42: #{tpu_custom_call.1} parent=39 // pred_check_branch
          %278 = sbr.rel (%p276) target = $region44
        $region43: #{tpu_custom_call.1} parent=39 // pred_region
          %280 = dma.done %s273, 16
        $region44: #{tpu_custom_call.1} parent=39 // pred_fallthru
          _
        %s281 = sand.u32 %s26, 1
        %s282 = scalar_lea.sflag [#allocation6], %s281
        %s283 = sand.u32 %s60, 1
        %s284 = scalar_lea.vmem [#allocation5], %s283
        // Predicated region
        $region45: #{tpu_custom_call.1} parent=39 // pred_check
          %p285 = pneg %p73
        $region46: #{tpu_custom_call.1} parent=39 // pred_check_branch
          %287 = sbr.rel (%p285) target = $region48
        $region47: #{tpu_custom_call.1} parent=39 // pred_region
          %289 = dma.done %s282, 16
        $region48: #{tpu_custom_call.1} parent=39 // pred_fallthru
          _
        %s290 = sand.u32 %s26, 1
        %s291 = scalar_lea.sflag [#allocation6], %s290
        %s292 = sand.u32 %s86, 1
        %s293 = scalar_lea.vmem [#allocation7], %s292
        // Predicated region
        $region49: #{tpu_custom_call.1} parent=39 // pred_check
          %p294 = pneg %p99
        $region50: #{tpu_custom_call.1} parent=39 // pred_check_branch
          %296 = sbr.rel (%p294) target = $region52
        $region51: #{tpu_custom_call.1} parent=39 // pred_region
          %298 = dma.done %s291, 16
        $region52: #{tpu_custom_call.1} parent=39 // pred_fallthru
          _
        // Predicated region
        $region53: #{tpu_custom_call.1} parent=39 // pred_check
          %p299 = pneg %p120
        $region54: #{tpu_custom_call.1} parent=39 // pred_check_branch
          %301 = sbr.rel (%p299) target = $region56
        $region55: #{tpu_custom_call.1} parent=39 // pred_region
          %303 = dma.done [#allocation9], 512
        $region56: #{tpu_custom_call.1} parent=39 // pred_fallthru
          _
        // Predicated region
        $region57: #{tpu_custom_call.1} parent=39 // pred_check
          %p304 = pneg %p141
        $region58: #{tpu_custom_call.1} parent=39 // pred_check_branch
          %306 = sbr.rel (%p304) target = $region60
        $region59: #{tpu_custom_call.1} parent=39 // pred_region
          %308 = dma.done [#allocation9], 512
        $region60: #{tpu_custom_call.1} parent=39 // pred_fallthru
          _
        %s309 = sand.u32 %s34, 1
        %s310 = scalar_lea.sflag [#allocation3], %s309
        %s311 = sand.u32 %s34, 1
        %s312 = scalar_lea.vmem [#allocation2], %s311
        %p313 = pneg %p47
        %p314 = pneg %p44
        %s315 = sand.u32 %s26, 1
        %s316 = scalar_lea.sflag [#allocation6], %s315
        %s317 = sand.u32 %s60, 1
        %s318 = scalar_lea.vmem [#allocation5], %s317
        %p319 = pneg %p73
        %p320 = pneg %p70
        %s321 = sand.u32 %s26, 1
        %s322 = scalar_lea.sflag [#allocation6], %s321
        %s323 = sand.u32 %s86, 1
        %s324 = scalar_lea.vmem [#allocation7], %s323
        %p325 = pneg %p99
        %p326 = pneg %p96
        %p327 = pneg %p120
        %p328 = pneg %p117
        %p329 = pneg %p141
        %p330 = pneg %p138
        %p331 = pneg %p167
        %p332 = pneg %p164
        %s333 = sand.u32 %s154, 1
        %s334 = scalar_lea.sflag [#allocation4], %s333
        %s335 = sand.u32 %s154, 1
        %s336 = smul.addr %s335, 2
        %s337 = scalar_lea.vmem [#allocation11], %s336
        %v339 = vld [vmem:[%s275] sm:$0x1]
        %v340 = vld [vmem:[%s284] sm:$0x1]
        %v341 = vld [vmem:[%s293] sm:$0x1]
        %v342 = vlaneseq
        %v343 = vshrl.u32 %v342, 7
        %v344 = vadd.s32 %v343, 8
        %v345 = vadd.s32 %v343, 16
        %v346 = vadd.s32 %v343, 24
        %v347 = vadd.s32 %v343, 32
        %v348 = vadd.s32 %v343, 40
        %v349 = vadd.s32 %v343, 48
        %v350 = vadd.s32 %v343, 56
        %v351 = vadd.s32 %v343, 64
        %v352 = vadd.s32 %v343, 72
        %v353 = vadd.s32 %v343, 80
        %v354 = vadd.s32 %v343, 88
        %v355 = vadd.s32 %v343, 96
        %v356 = vadd.s32 %v343, 104
        %v357 = vadd.s32 %v343, 112
        %v358 = vadd.s32 %v343, 120
        %v359 = vperm.slane %v339, 0
        %vm360 = vcmp.eq.s32.totalorder %v343, %v359
        %vm361 = vcmp.eq.s32.totalorder %v344, %v359
        %vm362 = vcmp.eq.s32.totalorder %v345, %v359
        %vm363 = vcmp.eq.s32.totalorder %v346, %v359
        %vm364 = vcmp.eq.s32.totalorder %v347, %v359
        %vm365 = vcmp.eq.s32.totalorder %v348, %v359
        %vm366 = vcmp.eq.s32.totalorder %v349, %v359
        %vm367 = vcmp.eq.s32.totalorder %v350, %v359
        %v368 = vsel %vm360, 1, 0
        %v369 = vsel %vm361, 1, 0
        %v370 = vsel %vm362, 1, 0
        %v371 = vsel %vm363, 1, 0
        %v372 = vsel %vm364, 1, 0
        %v373 = vsel %vm365, 1, 0
        %v374 = vsel %vm366, 1, 0
        %v375 = vsel %vm367, 1, 0
        %v376 = vcvt.s32.f32 %v368
        %v377 = vcvt.s32.f32 %v369
        %v378 = vcvt.s32.f32 %v370
        %v379 = vcvt.s32.f32 %v371
        %v380 = vcvt.s32.f32 %v372
        %v381 = vcvt.s32.f32 %v373
        %v382 = vcvt.s32.f32 %v374
        %v383 = vcvt.s32.f32 %v375
        %v384 = vpack.c.bf16 %v377, %v376
        %v385 = vpack.c.bf16 %v379, %v378
        %v386 = vpack.c.bf16 %v381, %v380
        %v387 = vpack.c.bf16 %v383, %v382
        %v388 = vperm.slane %v340, 0
        %v389 = vperm.slane %v341, 0
        %vm390 = vcmp.eq.s32.totalorder %v343, %v388
        %vm391 = vcmp.eq.s32.totalorder %v343, %v389
        %vm392 = vcmp.eq.s32.totalorder %v344, %v388
        %vm393 = vcmp.eq.s32.totalorder %v344, %v389
        %vm394 = vcmp.eq.s32.totalorder %v345, %v388
        %vm395 = vcmp.eq.s32.totalorder %v345, %v389
        %vm396 = vcmp.eq.s32.totalorder %v346, %v388
        %vm397 = vcmp.eq.s32.totalorder %v346, %v389
        %vm398 = vcmp.eq.s32.totalorder %v347, %v388
        %vm399 = vcmp.eq.s32.totalorder %v347, %v389
        %vm400 = vcmp.eq.s32.totalorder %v348, %v388
        %vm401 = vcmp.eq.s32.totalorder %v348, %v389
        %vm402 = vcmp.eq.s32.totalorder %v349, %v388
        %vm403 = vcmp.eq.s32.totalorder %v349, %v389
        %vm404 = vcmp.eq.s32.totalorder %v350, %v388
        %vm405 = vcmp.eq.s32.totalorder %v350, %v389
        %vm406 = vcmp.eq.s32.totalorder %v351, %v388
        %vm407 = vcmp.eq.s32.totalorder %v351, %v389
        %vm408 = vcmp.eq.s32.totalorder %v352, %v388
        %vm409 = vcmp.eq.s32.totalorder %v352, %v389
        %vm410 = vcmp.eq.s32.totalorder %v353, %v388
        %vm411 = vcmp.eq.s32.totalorder %v353, %v389
        %vm412 = vcmp.eq.s32.totalorder %v354, %v388
        %vm413 = vcmp.eq.s32.totalorder %v354, %v389
        %vm414 = vcmp.eq.s32.totalorder %v355, %v388
        %vm415 = vcmp.eq.s32.totalorder %v355, %v389
        %vm416 = vcmp.eq.s32.totalorder %v356, %v388
        %vm417 = vcmp.eq.s32.totalorder %v356, %v389
        %vm418 = vcmp.eq.s32.totalorder %v357, %v388
        %vm419 = vcmp.eq.s32.totalorder %v357, %v389
        %vm420 = vcmp.eq.s32.totalorder %v358, %v388
        %vm421 = vcmp.eq.s32.totalorder %v358, %v389
        %v422 = vsel %vm390, 1, 0
        %v423 = vsel %vm391, 1, 0
        %v424 = vsel %vm392, 1, 0
        %v425 = vsel %vm393, 1, 0
        %v426 = vsel %vm394, 1, 0
        %v427 = vsel %vm395, 1, 0
        %v428 = vsel %vm396, 1, 0
        %v429 = vsel %vm397, 1, 0
        %v430 = vsel %vm398, 1, 0
        %v431 = vsel %vm399, 1, 0
        %v432 = vsel %vm400, 1, 0
        %v433 = vsel %vm401, 1, 0
        %v434 = vsel %vm402, 1, 0
        %v435 = vsel %vm403, 1, 0
        %v436 = vsel %vm404, 1, 0
        %v437 = vsel %vm405, 1, 0
        %v438 = vsel %vm406, 1, 0
        %v439 = vsel %vm407, 1, 0
        %v440 = vsel %vm408, 1, 0
        %v441 = vsel %vm409, 1, 0
        %v442 = vsel %vm410, 1, 0
        %v443 = vsel %vm411, 1, 0
        %v444 = vsel %vm412, 1, 0
        %v445 = vsel %vm413, 1, 0
        %v446 = vsel %vm414, 1, 0
        %v447 = vsel %vm415, 1, 0
        %v448 = vsel %vm416, 1, 0
        %v449 = vsel %vm417, 1, 0
        %v450 = vsel %vm418, 1, 0
        %v451 = vsel %vm419, 1, 0
        %v452 = vsel %vm420, 1, 0
        %v453 = vsel %vm421, 1, 0
        %v454 = vcvt.s32.f32 %v422
        %v455 = vcvt.s32.f32 %v423
        %v456 = vcvt.s32.f32 %v424
        %v457 = vcvt.s32.f32 %v425
        %v458 = vcvt.s32.f32 %v426
        %v459 = vcvt.s32.f32 %v427
        %v460 = vcvt.s32.f32 %v428
        %v461 = vcvt.s32.f32 %v429
        %v462 = vcvt.s32.f32 %v430
        %v463 = vcvt.s32.f32 %v431
        %v464 = vcvt.s32.f32 %v432
        %v465 = vcvt.s32.f32 %v433
        %v466 = vcvt.s32.f32 %v434
        %v467 = vcvt.s32.f32 %v435
        %v468 = vcvt.s32.f32 %v436
        %v469 = vcvt.s32.f32 %v437
        %v470 = vcvt.s32.f32 %v438
        %v471 = vcvt.s32.f32 %v439
        %v472 = vcvt.s32.f32 %v440
        %v473 = vcvt.s32.f32 %v441
        %v474 = vcvt.s32.f32 %v442
        %v475 = vcvt.s32.f32 %v443
        %v476 = vcvt.s32.f32 %v444
        %v477 = vcvt.s32.f32 %v445
        %v478 = vcvt.s32.f32 %v446
        %v479 = vcvt.s32.f32 %v447
        %v480 = vcvt.s32.f32 %v448
        %v481 = vcvt.s32.f32 %v449
        %v482 = vcvt.s32.f32 %v450
        %v483 = vcvt.s32.f32 %v451
        %v484 = vcvt.s32.f32 %v452
        %v485 = vcvt.s32.f32 %v453
        %v486 = vpack.c.bf16 %v456, %v454
        %v487 = vpack.c.bf16 %v457, %v455
        %v488 = vpack.c.bf16 %v460, %v458
        %v489 = vpack.c.bf16 %v461, %v459
        %v490 = vpack.c.bf16 %v464, %v462
        %v491 = vpack.c.bf16 %v465, %v463
        %v492 = vpack.c.bf16 %v468, %v466
        %v493 = vpack.c.bf16 %v469, %v467
        %v494 = vpack.c.bf16 %v472, %v470
        %v495 = vpack.c.bf16 %v473, %v471
        %v496 = vpack.c.bf16 %v476, %v474
        %v497 = vpack.c.bf16 %v477, %v475
        %v498 = vpack.c.bf16 %v480, %v478
        %v499 = vpack.c.bf16 %v481, %v479
        %v500 = vpack.c.bf16 %v484, %v482
        %v501 = vpack.c.bf16 %v485, %v483
        %v502 = vld [vmem:[#allocation8] sm:$0xf]
        %v503 = vld [vmem:[#allocation8 + $0x4] sm:$0xf]
        %v504 = vld [vmem:[#allocation8 + $0x8] sm:$0xf]
        %v505 = vld [vmem:[#allocation8 + $0xc] sm:$0xf]
        %v506 = vld [vmem:[#allocation8 + $0x10] sm:$0xf]
        %v507 = vld [vmem:[#allocation8 + $0x14] sm:$0xf]
        %v508 = vld [vmem:[#allocation8 + $0x18] sm:$0xf]
        %v509 = vld [vmem:[#allocation8 + $0x1c] sm:$0xf]
        %v518 = vunpack.c.l.b16 %v502
        %v519 = vunpack.c.l.b16 %v503
        %v520 = vunpack.c.l.b16 %v504
        %v521 = vunpack.c.l.b16 %v505
        %v522 = vunpack.c.l.b16 %v506
        %v523 = vunpack.c.l.b16 %v507
        %v524 = vunpack.c.l.b16 %v508
        %v525 = vunpack.c.l.b16 %v509
        %v526 = vpack.c.b16 %v519, %v518
        %v527 = vpack.c.b16 %v521, %v520
        %v528 = vpack.c.b16 %v523, %v522
        %v529 = vpack.c.b16 %v525, %v524
        %vm530 = vcmask 523264
        %v532 = vsel %vm530, %v526, 0
        %v535 = vsel %vm530, %v527, 0
        %v538 = vsel %vm530, %v528, 0
        %v541 = vsel %vm530, %v529, 0
        %543 = vmatpush.bf16.msra.mxu0 0
        %544 = vmatpush.bf16.msra.mxu0 0
        %545 = vmatpush.bf16.msra.mxu0 0
        %546 = vmatpush.bf16.msra.mxu0 0
        %547 = vmatpush.bf16.msra.mxu0 %v387
        %548 = vmatpush.bf16.msra.mxu0 %v386
        %549 = vmatpush.bf16.msra.mxu0 %v385
        %550 = vmatpush.bf16.msra.mxu0 %v384
        %551 = vmatmul.bf16.gmra.mxu0 %v532
        %v552 = vpop.f32.mrf.mxu0
        %v553 = vadd.f32 0.0, %v552
        %v554 = vpop.f32.mrf.mxu0
        %v555 = vadd.f32 0.0, %v554
        %556 = vmatmul.bf16.gmra.mxu0 %v535
        %v557 = vpop.f32.mrf.mxu0
        %v558 = vadd.f32 0.0, %v557
        %v559 = vpop.f32.mrf.mxu0
        %v560 = vadd.f32 0.0, %v559
        %561 = vmatmul.bf16.gmra.mxu0 %v538
        %v562 = vpop.f32.mrf.mxu0
        %v563 = vadd.f32 0.0, %v562
        %v564 = vpop.f32.mrf.mxu0
        %v565 = vadd.f32 0.0, %v564
        %566 = vmatmul.bf16.gmra.mxu0 %v541
        %v567 = vpop.f32.mrf.mxu0
        %v568 = vadd.f32 0.0, %v567
        %v569 = vpop.f32.mrf.mxu0
        %v570 = vadd.f32 0.0, %v569
        %571 = vdwg.mxu0
        %v572 = vld [vmem:[#allocation10] sm:$0xf]
        %v573 = vld [vmem:[#allocation10 + $0x4] sm:$0xf]
        %v574 = vld [vmem:[#allocation10 + $0x8] sm:$0xf]
        %v575 = vld [vmem:[#allocation10 + $0xc] sm:$0xf]
        %v576 = vld [vmem:[#allocation10 + $0x10] sm:$0xf]
        %v577 = vld [vmem:[#allocation10 + $0x14] sm:$0xf]
        %v578 = vld [vmem:[#allocation10 + $0x18] sm:$0xf]
        %v579 = vld [vmem:[#allocation10 + $0x1c] sm:$0xf]
        %v588 = vunpack.c.l.b16 %v572
        %v589 = vunpack.c.l.b16 %v573
        %v590 = vunpack.c.l.b16 %v574
        %v591 = vunpack.c.l.b16 %v575
        %v592 = vunpack.c.l.b16 %v576
        %v593 = vunpack.c.l.b16 %v577
        %v594 = vunpack.c.l.b16 %v578
        %v595 = vunpack.c.l.b16 %v579
        %v596 = vpack.c.b16 %v589, %v588
        %v597 = vpack.c.b16 %v591, %v590
        %v598 = vpack.c.b16 %v593, %v592
        %v599 = vpack.c.b16 %v595, %v594
        %604 = vmatpush.bf16.msra.mxu0 %v500
        %605 = vmatpush.bf16.msra.mxu0 %v498
        %606 = vmatpush.bf16.msra.mxu0 %v496
        %607 = vmatpush.bf16.msra.mxu0 %v494
        %608 = vmatpush.bf16.msra.mxu0 %v492
        %609 = vmatpush.bf16.msra.mxu0 %v490
        %610 = vmatpush.bf16.msra.mxu0 %v488
        %611 = vmatpush.bf16.msra.mxu0 %v486
        %612 = vmatmul.bf16.gmra.mxu0 %v596
        %v613 = vpop.f32.mrf.mxu0
        %v614 = vadd.f32 0.0, %v613
        %v615 = vpop.f32.mrf.mxu0
        %v616 = vadd.f32 0.0, %v615
        %617 = vmatmul.bf16.gmra.mxu0 %v597
        %v618 = vpop.f32.mrf.mxu0
        %v619 = vadd.f32 0.0, %v618
        %v620 = vpop.f32.mrf.mxu0
        %v621 = vadd.f32 0.0, %v620
        %622 = vmatmul.bf16.gmra.mxu0 %v598
        %v623 = vpop.f32.mrf.mxu0
        %v624 = vadd.f32 0.0, %v623
        %v625 = vpop.f32.mrf.mxu0
        %v626 = vadd.f32 0.0, %v625
        %627 = vmatmul.bf16.gmra.mxu0 %v599
        %v628 = vpop.f32.mrf.mxu0
        %v629 = vadd.f32 0.0, %v628
        %v630 = vpop.f32.mrf.mxu0
        %v631 = vadd.f32 0.0, %v630
        %632 = vdwg.mxu0
        %633 = vmatpush.bf16.msra.mxu0 %v501
        %634 = vmatpush.bf16.msra.mxu0 %v499
        %635 = vmatpush.bf16.msra.mxu0 %v497
        %636 = vmatpush.bf16.msra.mxu0 %v495
        %637 = vmatpush.bf16.msra.mxu0 %v493
        %638 = vmatpush.bf16.msra.mxu0 %v491
        %639 = vmatpush.bf16.msra.mxu0 %v489
        %640 = vmatpush.bf16.msra.mxu0 %v487
        %641 = vmatmul.bf16.gmra.mxu0 %v596
        %v642 = vpop.f32.mrf.mxu0
        %v643 = vadd.f32 0.0, %v642
        %v644 = vpop.f32.mrf.mxu0
        %v645 = vadd.f32 0.0, %v644
        %646 = vmatmul.bf16.gmra.mxu0 %v597
        %v647 = vpop.f32.mrf.mxu0
        %v648 = vadd.f32 0.0, %v647
        %v649 = vpop.f32.mrf.mxu0
        %v650 = vadd.f32 0.0, %v649
        %651 = vmatmul.bf16.gmra.mxu0 %v598
        %v652 = vpop.f32.mrf.mxu0
        %v653 = vadd.f32 0.0, %v652
        %v654 = vpop.f32.mrf.mxu0
        %v655 = vadd.f32 0.0, %v654
        %656 = vmatmul.bf16.gmra.mxu0 %v599
        %v657 = vpop.f32.mrf.mxu0
        %v658 = vadd.f32 0.0, %v657
        %v659 = vpop.f32.mrf.mxu0
        %v660 = vadd.f32 0.0, %v659
        %661 = vdwg.mxu0
        %v662 = vadd.f32 %v553, %v563
        %v663 = vadd.f32 %v555, %v565
        %v664 = vadd.f32 %v558, %v568
        %v665 = vadd.f32 %v560, %v570
        %v666 = vadd.f32 %v614, %v624
        %v667 = vadd.f32 %v643, %v653
        %v668 = vadd.f32 %v616, %v626
        %v669 = vadd.f32 %v645, %v655
        %v670 = vadd.f32 %v619, %v629
        %v671 = vadd.f32 %v648, %v658
        %v672 = vadd.f32 %v621, %v631
        %v673 = vadd.f32 %v650, %v660
        %v674 = vmul.f32 %v662, %v666
        %v675 = vmul.f32 %v663, %v668
        %v676 = vmul.f32 %v664, %v670
        %v677 = vmul.f32 %v665, %v672
        %v678 = vadd.f32 %v674, %v675
        %v679 = vadd.f32 %v678, %v676
        %v680 = vadd.f32 %v679, %v677
        %v681 = vrot.slane %v680, 4
        %v682 = vadd.f32 %v680, %v681
        %v683 = vrot.slane %v682, 2
        %v684 = vadd.f32 %v682, %v683
        %v685 = vrot.slane %v684, 1
        %v686 = vadd.f32 %v684, %v685
        %687 = vst [vmem:[%s337] sm:$0x1] %v686
        %v688 = vmul.f32 %v662, %v667
        %v689 = vmul.f32 %v663, %v669
        %v690 = vmul.f32 %v664, %v671
        %v691 = vmul.f32 %v665, %v673
        %v692 = vadd.f32 %v688, %v689
        %v693 = vadd.f32 %v692, %v690
        %v694 = vadd.f32 %v693, %v691
        %v695 = vrot.slane %v694, 4
        %v696 = vadd.f32 %v694, %v695
        %v697 = vrot.slane %v696, 2
        %v698 = vadd.f32 %v696, %v697
        %v699 = vrot.slane %v698, 1
        %v700 = vadd.f32 %v698, %v699
        %701 = vst [vmem:[%s337 + $0x1] sm:$0x1] %v700
        %s702 = sand.u32 %s154, 1
        %s703 = scalar_lea.sflag [#allocation4], %s702
        %s704 = sand.u32 %s154, 1
        %s705 = smul.addr %s704, 2
        %s706 = scalar_lea.vmem [#allocation11], %s705
        // Predicated region
        $region61: #{tpu_custom_call.1} parent=39 // pred_check
          %p707 = pneg %p164
        $region62: #{tpu_custom_call.1} parent=39 // pred_check_branch
          %709 = sbr.rel (%p707) target = $region64
        $region63: #{tpu_custom_call.1} parent=39 // pred_region
          %711 = vsyncadd %s703, 0
          %s712 = smul.addr %s26, 2
          %s713 = scalar_lea.hbm %s5, %s712
          %s715 = sshll.u32 %s706, 4
          %s716 = int_to_ptr.vmem [resolvable:$true] %s715
          %s717 = sshll.u32 %s713, 4
          %s718 = int_to_ptr.hbm [resolvable:$true] %s717
          %720 = dma.vmem_to_hbm [thread:$0]  %s716, 32, %s718, %s703
        $region64: #{tpu_custom_call.1} parent=39 // pred_fallthru
          _
      $region40: #{tpu_custom_call.1} parent=5 // pred_fallthru
        _
      %p721 = scmp.le.s32.totalorder 2, %s21
      // Predicated region
      $region65: #{tpu_custom_call.1} parent=5 // pred_check
        %p722 = pneg %p721
      $region66: #{tpu_custom_call.1} parent=5 // pred_check_branch
        %724 = sbr.rel (%p722) target = $region68
      $region67: #{tpu_custom_call.1} parent=5 // pred_region
        %s725 = ssub.s32 %s21, 2
        // Predicated region
        $region69: #{tpu_custom_call.1} parent=67 // pred_check
          %p726 = pneg %p170
        $region70: #{tpu_custom_call.1} parent=67 // pred_check_branch
          %728 = sbr.rel (%p726) target = $region72
        $region71: #{tpu_custom_call.1} parent=67 // pred_region
          %s729 = sand.u32 %s155, 1
          %s730 = scalar_lea.sflag [#allocation4], %s729
          %s731 = sand.u32 %s155, 1
          %s732 = smul.addr %s731, 2
          %s733 = scalar_lea.vmem [#allocation11], %s732
          %735 = dma.done %s730, 32
        $region72: #{tpu_custom_call.1} parent=67 // pred_fallthru
          _
      $region68: #{tpu_custom_call.1} parent=5 // pred_fallthru
        _
    $region6: #{tpu_custom_call.1} parent=1 // loop_footer
      %s25 = sadd.s32 1, %s21
    $region7: #{tpu_custom_call.1} parent=1 // loop_footer_branch
      %20 = sbr.rel target = $region3
    $region8: #{tpu_custom_call.1} parent=1 // loop_exit
      _
    %736 = vsyncpa [#allocation3], 1
    %s737 = scalar_lea.sflag [#allocation3], 1
    %738 = vsyncpa %s737, 1
    %739 = vsyncpa [#allocation6], 1
    %s740 = scalar_lea.sflag [#allocation6], 1
    %741 = vsyncpa %s740, 1
    %742 = vsyncpa [#allocation9], 1
    %743 = vsyncpa [#allocation4], 1
    %s744 = scalar_lea.sflag [#allocation4], 1
    %745 = vsyncpa %s744, 1

</llo_original>
